<compile_context>
chip_gen: v7x
topology: tpu7x:2x2x1
jax: 0.10.0
libtpu: 0.0.40
codegen_flags: <defaults>
</compile_context>

<pallas_src>
import functools

import jax
import jax.numpy as jnp
from jax.experimental import pallas as pl
from jax.experimental.pallas import tpu as pltpu


def _round_up(n: int, m: int) -> int:
    return (n + m - 1) // m * m


# ------------------------------------------------------------------------------ kernel


def _adv_net_kernel(x_ref, w1_ref, w2_ref, w3t_ref, bias_ref, o_ref):
    """One batch tile of the eval-mode MLP forward.

    x_ref   : (TB, F)  f32
    w1_ref  : (F, H)   bf16  (BN1 scale folded in)
    w2_ref  : (H, H)   bf16  (BN2 scale folded in)
    w3t_ref : (1, H)   bf16  (final projection, transposed)
    bias_ref: (8, H)   f32   packed biases: row0=b1', row1=b2', row2=lane-broadcast b3
    o_ref   : (1, TB)  f32   lane-dense output slab (batch along lanes)
    """
    # bf16 MXU inputs, f32 accumulation; elementwise math kept f32 (safe on v5e/v6e/v7x).
    x = x_ref[...].astype(jnp.bfloat16)
    b = bias_ref[...]                                                        # (8, H) f32

    h1 = jnp.dot(x, w1_ref[...], preferred_element_type=jnp.float32)        # (TB, H)
    h1 = jnp.maximum(h1 + b[0:1, :], 0.0)                                   # folded BN+bias, ReLU

    h2 = jnp.dot(h1.astype(jnp.bfloat16), w2_ref[...],
                 preferred_element_type=jnp.float32)                        # (TB, H)
    h2 = jnp.maximum(h2 + b[1:2, :], 0.0)

    # Final projection as (1,H) contracted with (TB,H) over H -> (1,TB): result is
    # lane-dense (batch on lanes) so the output store is unmasked, instead of an N=1
    # matmul + 1-lane-wide (TB,1) masked store.  The implicit (TB,H) transpose this
    # pushes onto the XLU is tiny at H=32 and stays off the DMA-bound critical path.
    z = jax.lax.dot_general(
        w3t_ref[...], h2.astype(jnp.bfloat16),
        dimension_numbers=(((1,), (1,)), ((), ())),
        preferred_element_type=jnp.float32)                                 # (1, TB)
    o_ref[...] = jax.nn.sigmoid(z + b[2:3, 0:1])


# --------------------------------------------------------------------------- tile plan


def _vmem_budget():
    """(physical_vmem_bytes, scoped_vmem_limit_bytes) with a conservative fallback."""
    try:
        phys = int(pltpu.get_tpu_info().vmem_capacity_bytes)
    except Exception:
        phys = 64 << 20  # assume the smallest current generation (v7x) if the query fails
    # ~70% of physical on v7x (64 MiB), capped at 96 MiB on v5e/v6e (128 MiB physical;
    # their scoped defaults are only 16 / 32 MiB, so raise explicitly).
    limit = max(32 << 20, min(phys * 7 // 10, 96 << 20))
    return phys, limit


def _plan_tiles(B, F, H):
    """Pick (TB, padded_B, vmem_limit_bytes) from a VMEM budget, not a hard cap."""
    _, vmem_limit = _vmem_budget()
    # Per-batch-row footprint (bytes): double-buffered f32 x tile + its bf16 copy,
    # f32+bf16 h1 and h2 intermediates, double-buffered f32 output lane.
    bytes_per_row = 2 * F * 4 + F * 2 + 2 * (H * 4 + H * 2) + 2 * 4
    # Fixed footprint: (double-buffered) weights + packed bias + ~1 MiB slack.
    fixed = 2 * (F * H * 2 + H * H * 2 + H * 2 + 8 * H * 4) + (1 << 20)
    cap_rows = max(vmem_limit - fixed, 0) // bytes_per_row
    cap_rows = max(256, cap_rows // 128 * 128)   # multiple of 128 for the (1,TB) store
    cap_rows = min(cap_rows, 8192)               # enough to amortize ~0.35us/step overhead

    if B <= 256:
        tb = _round_up(B, 8)                     # single tile; fixed cost dominates anyway
    else:
        # >=2 tiles so the "parallel" batch axis can shard across both v7x TensorCores.
        tb = min(cap_rows, _round_up((B + 1) // 2, 128))
    bp = _round_up(B, tb)
    return tb, bp, int(vmem_limit)


# ------------------------------------------------------------------------ wrapper/call


@functools.lru_cache(maxsize=None)
def _build_forward(B, F, H, TB, Bp, vmem_limit):
    num_tiles = Bp // TB
    const = lambda i: (0, 0)   # constant blocks: same block every step -> fetched once

    call = pl.pallas_call(
        _adv_net_kernel,
        out_shape=jax.ShapeDtypeStruct((1, Bp), jnp.float32),
        grid=(num_tiles,),
        in_specs=[
            pl.BlockSpec((TB, F), lambda i: (i, 0)),   # x: tiled over batch (double-buffered)
            pl.BlockSpec((F, H), const),               # W1' (bf16, BN1 folded)
            pl.BlockSpec((H, H), const),               # W2' (bf16, BN2 folded)
            pl.BlockSpec((1, H), const),               # W3^T (bf16)
            pl.BlockSpec((8, H), const),               # packed biases (b1', b2', b3)
        ],
        out_specs=pl.BlockSpec((1, TB), lambda i: (0, i)),
        compiler_params=pltpu.CompilerParams(
            dimension_semantics=("parallel",),
            vmem_limit_bytes=vmem_limit,
        ),
    )

    @jax.jit
    def fwd(x, w1f, w2f, w3t, bpack):
        if Bp != B:
            x = jnp.pad(x, ((0, Bp - B), (0, 0)))
        out = call(x, w1f, w2f, w3t, bpack)        # (1, Bp) lane-dense slab
        return out.reshape(Bp, 1)[:B]              # -> (B, 1)

    return fwd


def adversarial_network_forward(x, folded_params):
    """x: (B, in_feature) f32. Returns (B, 1) f32 sigmoid domain score (eval mode)."""
    B, F = x.shape
    w1f, w2f, w3t, bpack = folded_params
    H = w1f.shape[1]
    TB, Bp, vmem_limit = _plan_tiles(B, F, H)
    fwd = _build_forward(B, F, H, TB, Bp, vmem_limit)
    return fwd(x, w1f, w2f, w3t, bpack)


# ----------------------------------------------------------------------------- params


def init_raw_params(key, in_feature, hidden_size):
    """Synthetic parameters matching the PyTorch module's shapes (weights stored (in,out))."""
    ks = jax.random.split(key, 14)

    def linear(kw, kb, fan_in, fan_out):
        bound = 1.0 / (fan_in ** 0.5)
        w = jax.random.uniform(kw, (fan_in, fan_out), jnp.float32, -bound, bound)
        b = jax.random.uniform(kb, (1, fan_out), jnp.float32, -bound, bound)
        return w, b

    w1, b1 = linear(ks[0], ks[1], in_feature, hidden_size)
    w2, b2 = linear(ks[2], ks[3], hidden_size, hidden_size)
    w3, b3 = linear(ks[4], ks[5], hidden_size, 1)

    def bn(kg, kb, km, kv, n):
        gamma = 1.0 + 0.1 * jax.random.normal(kg, (1, n), jnp.float32)
        beta = 0.1 * jax.random.normal(kb, (1, n), jnp.float32)
        mean = 0.1 * jax.random.normal(km, (1, n), jnp.float32)
        var = jax.random.uniform(kv, (1, n), jnp.float32, 0.5, 1.5)
        return gamma, beta, mean, var

    g1, be1, m1, v1 = bn(ks[6], ks[7], ks[8], ks[9], hidden_size)
    g2, be2, m2, v2 = bn(ks[10], ks[11], ks[12], ks[13], hidden_size)
    return (w1, b1, g1, be1, m1, v1, w2, b2, g2, be2, m2, v2, w3, b3)


def fold_params(raw, eps=1e-5):
    """Fold eval-mode BatchNorm + biases into the linears; pack all biases into one (8,H)."""
    (w1, b1, g1, be1, m1, v1, w2, b2, g2, be2, m2, v2, w3, b3) = raw
    H = w1.shape[1]
    s1 = g1 / jnp.sqrt(v1 + eps)
    t1 = be1 - m1 * s1
    s2 = g2 / jnp.sqrt(v2 + eps)
    t2 = be2 - m2 * s2
    w1f = (w1 * s1).astype(jnp.bfloat16)          # (F, H)
    w2f = (w2 * s2).astype(jnp.bfloat16)          # (H, H)
    w3t = w3.T.astype(jnp.bfloat16)               # (1, H)
    b1f = (b1 * s1 + t1)[0]                       # (H,)
    b2f = (b2 * s2 + t2)[0]                       # (H,)
    bpack = jnp.zeros((8, H), jnp.float32)        # sublane-padded single bias operand
    bpack = bpack.at[0, :].set(b1f)
    bpack = bpack.at[1, :].set(b2f)
    bpack = bpack.at[2, :].set(jnp.full((H,), b3[0, 0], jnp.float32))
    return (w1f, w2f, w3t, bpack)


# -------------------------------------------------------------------------- references


def _reference_forward_bf16(x, folded):
    """Plain-JAX reference matching the kernel's numerics (bf16 matmul inputs, f32 math)."""
    w1f, w2f, w3t, bpack = folded
    f32 = lambda a: a.astype(jnp.float32)
    b1f, b2f, b3 = bpack[0:1, :], bpack[1:2, :], bpack[2, 0]
    xb = f32(x.astype(jnp.bfloat16))
    h1 = jnp.maximum(xb @ f32(w1f) + b1f, 0.0)
    h2 = jnp.maximum(f32(h1.astype(jnp.bfloat16)) @ f32(w2f) + b2f, 0.0)
    z = f32(h2.astype(jnp.bfloat16)) @ f32(w3t).T + b3
    return jax.nn.sigmoid(z)


def _reference_forward_f32(x, raw, eps=1e-5):
    """Full-f32, un-folded reference of the original eval-mode module semantics."""
    (w1, b1, g1, be1, m1, v1, w2, b2, g2, be2, m2, v2, w3, b3) = raw
    h = x @ w1 + b1
    h = jnp.maximum((h - m1) / jnp.sqrt(v1 + eps) * g1 + be1, 0.0)
    h = h @ w2 + b2
    h = jnp.maximum((h - m2) / jnp.sqrt(v2 + eps) * g2 + be2, 0.0)
    return jax.nn.sigmoid(h @ w3 + b3)


if __name__ == "__main__":
    key = jax.random.PRNGKey(0)
    k_x, k_x2, k_p = jax.random.split(key, 3)

    in_feature, hidden_size = 32, 32
    raw = init_raw_params(k_p, in_feature, hidden_size)
    folded = fold_params(raw)

    # Small batch: single-tile path.
    x = jax.random.normal(k_x, (8, in_feature), jnp.float32)
    y = jax.block_until_ready(adversarial_network_forward(x, folded))
    assert y.shape == (8, 1)
    assert jnp.allclose(y, _reference_forward_bf16(x, folded), atol=1e-4, rtol=1e-4)
    assert jnp.allclose(y, _reference_forward_f32(x, raw), atol=2e-2, rtol=2e-2)

    # Larger batch: exercises the >=2-tile grid (megacore-shardable) and batch padding.
    x2 = jax.random.normal(k_x2, (300, in_feature), jnp.float32)
    y2 = jax.block_until_ready(adversarial_network_forward(x2, folded))
    assert y2.shape == (300, 1)
    assert jnp.allclose(y2, _reference_forward_bf16(x2, folded), atol=1e-4, rtol=1e-4)
    assert jnp.allclose(y2, _reference_forward_f32(x2, raw), atol=2e-2, rtol=2e-2)

    print("KERNEL_OK")
</pallas_src>

<mosaic_0001>
module attributes {stable_mosaic.version = 11 : i64} {
  func.func @_adv_net_kernel(%arg0: i32, %arg1: memref<8x32xf32, #tpu.memory_space<vmem>>, %arg2: memref<32x32xbf16, #tpu.memory_space<vmem>>, %arg3: memref<32x32xbf16, #tpu.memory_space<vmem>>, %arg4: memref<1x32xbf16, #tpu.memory_space<vmem>>, %arg5: memref<8x32xf32, #tpu.memory_space<vmem>>, %arg6: memref<1x8xf32, #tpu.memory_space<vmem>>) attributes {dimension_semantics = [#tpu.dimension_semantics<parallel>], iteration_bounds = array<i64: 1>, scalar_prefetch = 0 : i64, scratch_operands = 0 : i64, tpu.core_type = #tpu.core_type<tc>, window_params = [{transform_indices = @transform_0, window_bounds = array<i64: 8, 32>}, {pipeline_mode = #tpu.pipeline_mode<synchronous>, transform_indices = @transform_1, window_bounds = array<i64: 32, 32>}, {pipeline_mode = #tpu.pipeline_mode<synchronous>, transform_indices = @transform_2, window_bounds = array<i64: 32, 32>}, {pipeline_mode = #tpu.pipeline_mode<synchronous>, transform_indices = @transform_3, window_bounds = array<i64: 1, 32>}, {pipeline_mode = #tpu.pipeline_mode<synchronous>, transform_indices = @transform_4, window_bounds = array<i64: 8, 32>}, {transform_indices = @transform_5, window_bounds = array<i64: 1, 8>}]} {
    %c0 = arith.constant 0 : index
    %c0_0 = arith.constant 0 : index
    %0 = vector.load %arg1[%c0, %c0_0] : memref<8x32xf32, #tpu.memory_space<vmem>>, vector<8x32xf32>
    %1 = arith.truncf %0 : vector<8x32xf32> to vector<8x32xbf16>
    %c0_1 = arith.constant 0 : index
    %c0_2 = arith.constant 0 : index
    %2 = vector.load %arg5[%c0_1, %c0_2] : memref<8x32xf32, #tpu.memory_space<vmem>>, vector<8x32xf32>
    %c0_3 = arith.constant 0 : index
    %c0_4 = arith.constant 0 : index
    %3 = vector.load %arg2[%c0_3, %c0_4] : memref<32x32xbf16, #tpu.memory_space<vmem>>, vector<32x32xbf16>
    %cst = arith.constant dense<0.000000e+00> : vector<8x32xf32>
    %4 = tpu.matmul %1, %3, %cst {dimension_numbers = #tpu.dot_dimension_numbers<[1], [0], [0], [1], [0, 0, 1, 1], [], []>} : vector<8x32xbf16>, vector<32x32xbf16>, vector<8x32xf32> -> vector<8x32xf32>
    %5 = vector.extract_strided_slice %2 {offsets = [0, 0], sizes = [1, 32], strides = [1, 1]} : vector<8x32xf32> to vector<1x32xf32>
    %6 = vector.broadcast %5 : vector<1x32xf32> to vector<8x32xf32>
    %7 = arith.addf %4, %6 : vector<8x32xf32>
    %cst_5 = arith.constant 0.000000e+00 : f32
    %8 = vector.broadcast %cst_5 : f32 to vector<8x32xf32>
    %9 = arith.maximumf %7, %8 : vector<8x32xf32>
    %10 = arith.truncf %9 : vector<8x32xf32> to vector<8x32xbf16>
    %c0_6 = arith.constant 0 : index
    %c0_7 = arith.constant 0 : index
    %11 = vector.load %arg3[%c0_6, %c0_7] : memref<32x32xbf16, #tpu.memory_space<vmem>>, vector<32x32xbf16>
    %cst_8 = arith.constant dense<0.000000e+00> : vector<8x32xf32>
    %12 = tpu.matmul %10, %11, %cst_8 {dimension_numbers = #tpu.dot_dimension_numbers<[1], [0], [0], [1], [0, 0, 1, 1], [], []>} : vector<8x32xbf16>, vector<32x32xbf16>, vector<8x32xf32> -> vector<8x32xf32>
    %13 = vector.extract_strided_slice %2 {offsets = [1, 0], sizes = [1, 32], strides = [1, 1]} : vector<8x32xf32> to vector<1x32xf32>
    %14 = vector.broadcast %13 : vector<1x32xf32> to vector<8x32xf32>
    %15 = arith.addf %12, %14 : vector<8x32xf32>
    %cst_9 = arith.constant 0.000000e+00 : f32
    %16 = vector.broadcast %cst_9 : f32 to vector<8x32xf32>
    %17 = arith.maximumf %15, %16 : vector<8x32xf32>
    %c0_10 = arith.constant 0 : index
    %c0_11 = arith.constant 0 : index
    %18 = vector.load %arg4[%c0_10, %c0_11] : memref<1x32xbf16, #tpu.memory_space<vmem>>, vector<1x32xbf16>
    %19 = arith.truncf %17 : vector<8x32xf32> to vector<8x32xbf16>
    %cst_12 = arith.constant dense<0.000000e+00> : vector<1x8xf32>
    %20 = tpu.matmul %18, %19, %cst_12 {dimension_numbers = #tpu.dot_dimension_numbers<[1], [1], [0], [0], [0, 0, 1, 0], [], []>} : vector<1x32xbf16>, vector<8x32xbf16>, vector<1x8xf32> -> vector<1x8xf32>
    %21 = vector.extract_strided_slice %2 {offsets = [2, 0], sizes = [1, 1], strides = [1, 1]} : vector<8x32xf32> to vector<1x1xf32>
    %22 = vector.broadcast %21 : vector<1x1xf32> to vector<1x8xf32>
    %23 = arith.addf %20, %22 : vector<1x8xf32>
    %24 = arith.negf %23 : vector<1x8xf32>
    %25 = math.exp %24 : vector<1x8xf32>
    %cst_13 = arith.constant 1.000000e+00 : f32
    %26 = vector.broadcast %cst_13 : f32 to vector<1x8xf32>
    %27 = arith.addf %26, %25 : vector<1x8xf32>
    %28 = arith.divf %26, %27 : vector<1x8xf32>
    %c0_14 = arith.constant 0 : index
    %c0_15 = arith.constant 0 : index
    %29 = vector.load %arg6[%c0_14, %c0_15] : memref<1x8xf32, #tpu.memory_space<vmem>>, vector<1x8xf32>
    tpu.vector_store %arg6[%c0_14, %c0_15], %28 {strides = array<i32>} : memref<1x8xf32, #tpu.memory_space<vmem>>, vector<1x8xf32>,
    return
  }
  func.func @transform_0(%arg0: i32) -> (i32, i32) {
    %c0_i32 = arith.constant 0 : i32
    %c0_i32_0 = arith.constant 0 : i32
    return %arg0, %c0_i32 : i32, i32
  }
  func.func @transform_1(%arg0: i32) -> (i32, i32) {
    %c0_i32 = arith.constant 0 : i32
    %c0_i32_0 = arith.constant 0 : i32
    %c0_i32_1 = arith.constant 0 : i32
    return %c0_i32, %c0_i32_0 : i32, i32
  }
  func.func @transform_2(%arg0: i32) -> (i32, i32) {
    %c0_i32 = arith.constant 0 : i32
    %c0_i32_0 = arith.constant 0 : i32
    %c0_i32_1 = arith.constant 0 : i32
    return %c0_i32, %c0_i32_0 : i32, i32
  }
  func.func @transform_3(%arg0: i32) -> (i32, i32) {
    %c0_i32 = arith.constant 0 : i32
    %c0_i32_0 = arith.constant 0 : i32
    %c0_i32_1 = arith.constant 0 : i32
    return %c0_i32, %c0_i32_0 : i32, i32
  }
  func.func @transform_4(%arg0: i32) -> (i32, i32) {
    %c0_i32 = arith.constant 0 : i32
    %c0_i32_0 = arith.constant 0 : i32
    %c0_i32_1 = arith.constant 0 : i32
    return %c0_i32, %c0_i32_0 : i32, i32
  }
  func.func @transform_5(%arg0: i32) -> (i32, i32) {
    %c0_i32 = arith.constant 0 : i32
    %c0_i32_0 = arith.constant 0 : i32
    return %c0_i32, %arg0 : i32, i32
  }
}

</mosaic_0001>

<llo_original>
// kernel: fwd.1
$region0: #{fwd.1}
  #allocation0 [shape = 'u32[]', space=smem, size = 0x4, offset = 0x4, fixed_abs, tag = 'smem constant byte address 0x4 - core index']
  #allocation1 [shape = 'u32[144,128]{1,0:T(1,128)}', space=vmem, size = 0x12000, scoped, tag = 'internal scratch']
  %s0 = inlined_call_operand.hbm [shape: f32[8,32], index: 0, kind: input, shape index: {}]
  %s1 = inlined_call_operand.hbm [shape: bf16[32,32], index: 1, kind: input, shape index: {}]
  %s2 = inlined_call_operand.hbm [shape: bf16[32,32], index: 2, kind: input, shape index: {}]
  %s3 = inlined_call_operand.vmem [shape: bf16[1,32], index: 3, kind: input, shape index: {}]
  %s4 = inlined_call_operand.vmem [shape: f32[8,32], index: 4, kind: input, shape index: {}]
  %s5 = inlined_call_operand.hbm [shape: f32[1,8], index: 5, kind: output, shape index: {}]
  %s6 = sld [smem:[#allocation0]]
  $region42: #{fwd.1} parent=0
    _
  %s8 = ssub.s32 1, %s6
  %s9 = scalar_select 0, %s8, %s6
  $region1: #{fwd.1} parent=0
    #allocation2 [shape = 'u8[4096]{0}', space=vmem, size = 0x1000, scoped, tag = 'input window, operand 0, single buffered']
    #allocation3 [shape = 's32[1]{0}', space=sflag, size = 0x4, scoped, tag = 'scoped memory for fwd.1']
    #allocation4 [shape = 's32[1]{0}', space=sflag, size = 0x4, scoped, tag = 'scoped memory for fwd.1']
    #allocation5 [shape = 'u8[8192]{0}', space=vmem, size = 0x2000, scoped, tag = 'input window, operand 1, single buffered']
    #allocation6 [shape = 's32[1]{0}', space=sflag, size = 0x4, scoped, tag = 'scoped memory for fwd.1']
    #allocation7 [shape = 'u8[8192]{0}', space=vmem, size = 0x2000, scoped, tag = 'input window, operand 2, single buffered']
    #allocation8 [shape = 'u8[512]{0}', space=vmem, size = 0x400, scoped, tag = 'output window, operand 0, single buffered']
    %10 = vsyncpa [#allocation3], 0
    %11 = vsyncpa [#allocation6], 0
    %12 = vsyncpa [#allocation4], 0
    // Predicated region
    $region2: #{fwd.1} parent=1 // pred_check
      _
    $region3: #{fwd.1} parent=1 // pred_check_branch
      %14 = sbr.rel (0) target = $region5
    $region4: #{fwd.1} parent=1 // pred_region
      %s16 = ssub.s32 128, 128
      %17 = vsyncadd [#allocation3], %s16
      %s19 = sshll.u32 [#allocation2], 4
      %s20 = int_to_ptr.vmem [resolvable:$true] %s19
      %22 = dma.hbm_to_vmem [thread:$0]  %s0, 128, %s20, [#allocation3]
    $region5: #{fwd.1} parent=1 // pred_fallthru
      _
    // Predicated region
    $region6: #{fwd.1} parent=1 // pred_check
      _
    $region7: #{fwd.1} parent=1 // pred_check_branch
      %24 = sbr.rel (0) target = $region9
    $region8: #{fwd.1} parent=1 // pred_region
      %s26 = ssub.s32 256, 256
      %27 = vsyncadd [#allocation6], %s26
      %s28 = sshll.u32 [#allocation5], 4
      %s29 = int_to_ptr.vmem [resolvable:$true] %s28
      %34 = dma.hbm_to_vmem [thread:$0]  %s1, 256, %s29, [#allocation6], 64, 64, 4
    $region9: #{fwd.1} parent=1 // pred_fallthru
      _
    // Predicated region
    $region10: #{fwd.1} parent=1 // pred_check
      _
    $region11: #{fwd.1} parent=1 // pred_check_branch
      %36 = sbr.rel (0) target = $region13
    $region12: #{fwd.1} parent=1 // pred_region
      %s38 = ssub.s32 256, 256
      %39 = vsyncadd [#allocation6], %s38
      %s40 = sshll.u32 [#allocation7], 4
      %s41 = int_to_ptr.vmem [resolvable:$true] %s40
      %46 = dma.hbm_to_vmem [thread:$0]  %s2, 256, %s41, [#allocation6], 64, 64, 4
    $region13: #{fwd.1} parent=1 // pred_fallthru
      _
    // Predicated region
    $region14: #{fwd.1} parent=1 // pred_check
      _
    $region15: #{fwd.1} parent=1 // pred_check_branch
      %48 = sbr.rel (0) target = $region17
    $region16: #{fwd.1} parent=1 // pred_region
      _
    $region17: #{fwd.1} parent=1 // pred_fallthru
      _
    // Predicated region
    $region18: #{fwd.1} parent=1 // pred_check
      _
    $region19: #{fwd.1} parent=1 // pred_check_branch
      %50 = sbr.rel (0) target = $region21
    $region20: #{fwd.1} parent=1 // pred_region
      _
    $region21: #{fwd.1} parent=1 // pred_fallthru
      _
    // Predicated region
    $region22: #{fwd.1} parent=1 // pred_check
      _
    $region23: #{fwd.1} parent=1 // pred_check_branch
      %52 = sbr.rel (0) target = $region25
    $region24: #{fwd.1} parent=1 // pred_region
      %53 = dma.done [#allocation3], 128
    $region25: #{fwd.1} parent=1 // pred_fallthru
      _
    // Predicated region
    $region26: #{fwd.1} parent=1 // pred_check
      _
    $region27: #{fwd.1} parent=1 // pred_check_branch
      %55 = sbr.rel (0) target = $region29
    $region28: #{fwd.1} parent=1 // pred_region
      %56 = dma.done [#allocation6], 256
    $region29: #{fwd.1} parent=1 // pred_fallthru
      _
    // Predicated region
    $region30: #{fwd.1} parent=1 // pred_check
      _
    $region31: #{fwd.1} parent=1 // pred_check_branch
      %58 = sbr.rel (0) target = $region33
    $region32: #{fwd.1} parent=1 // pred_region
      %59 = dma.done [#allocation6], 256
    $region33: #{fwd.1} parent=1 // pred_fallthru
      _
    %v61 = vld [vmem:[#allocation2] sm:$0xff]
    %v62 = vpack.c.bf16 %v61, %v61
    %v63 = vld [vmem:[%s4] sm:$0xff]
    %v64 = vld [vmem:[#allocation5] sm:$0xf]
    %v65 = vld [vmem:[#allocation5 + $0x4] sm:$0xf]
    %v66 = vld [vmem:[#allocation5 + $0x8] sm:$0xf]
    %v67 = vld [vmem:[#allocation5 + $0xc] sm:$0xf]
    %v68 = vlaneseq
    %v69 = vshrl.u32 %v68, 7
    %v70 = vsub.s32 0, %v69
    %v71 = vrot.slane %v63, %v70
    %v76 = vunpack.c.l.b16 %v64
    %v77 = vunpack.c.l.b16 %v65
    %v78 = vunpack.c.l.b16 %v66
    %v79 = vunpack.c.l.b16 %v67
    %v80 = vpack.c.b16 %v77, %v76
    %v81 = vpack.c.b16 %v79, %v78
    %vm84 = vcmask 261120
    %v86 = vsel %vm84, %v62, 0
    %88 = vmatprep.subr.bf16.mxu0 0
    %89 = vmatpush1.bf16.msra.mxu0 %v80
    %90 = vmatprep.subr.bf16.mxu0 0
    %91 = vmatpush1.bf16.msra.mxu0 %v81
    %92 = vmatprep.subr.bf16.mxu0 0
    %93 = vmatpush1.bf16.msra.mxu0 0
    %94 = vmatprep.subr.bf16.mxu0 0
    %95 = vmatpush1.bf16.msra.mxu0 0
    %96 = vmatprep.subr.bf16.mxu0 0
    %97 = vmatpush1.bf16.msra.mxu0 0
    %98 = vmatprep.subr.bf16.mxu0 0
    %99 = vmatpush1.bf16.msra.mxu0 0
    %100 = vmatprep.subr.bf16.mxu0 0
    %101 = vmatpush1.bf16.msra.mxu0 0
    %102 = vmatprep.subr.bf16.mxu0 0
    %103 = vmatpush1.bf16.msra.mxu0 0
    %104 = vmatprep.subr.bf16.mxu0 0
    %105 = vmatpush1.bf16.msra.mxu0 0
    %106 = vmatprep.subr.bf16.mxu0 0
    %107 = vmatpush1.bf16.msra.mxu0 0
    %108 = vmatprep.subr.bf16.mxu0 0
    %109 = vmatpush1.bf16.msra.mxu0 0
    %110 = vmatprep.subr.bf16.mxu0 0
    %111 = vmatpush1.bf16.msra.mxu0 0
    %112 = vmatprep.subr.bf16.mxu0 0
    %113 = vmatpush1.bf16.msra.mxu0 0
    %114 = vmatprep.subr.bf16.mxu0 0
    %115 = vmatpush1.bf16.msra.mxu0 0
    %116 = vmatprep.subr.bf16.mxu0 0
    %117 = vmatpush1.bf16.msra.mxu0 0
    %118 = vmatprep.subr.bf16.mxu0 0
    %119 = vmatpush1.bf16.msra.mxu0 0
    %120 = vmatprep.mubr.bf16.mxu0 0
    %121 = vmatmul.mubr.bf16.gmra.mrb[0].mxu0 %v86
    %v122 = vpop.f32.mrb[0].mxu0
    %v123 = vadd.f32 %v71, %v122
    %v124 = vpop.f32.mrb[0].mxu0
    %v125 = vpop.f32.mrb[0].mxu0
    %v126 = vpop.f32.mrb[0].mxu0
    %127 = vdwg.mxu0
    %v128 = vmax.f32 %v123, 0.0
    %v129 = vpack.c.bf16 %v128, %v128
    %v130 = vld [vmem:[#allocation7] sm:$0xf]
    %v131 = vld [vmem:[#allocation7 + $0x4] sm:$0xf]
    %v132 = vld [vmem:[#allocation7 + $0x8] sm:$0xf]
    %v133 = vld [vmem:[#allocation7 + $0xc] sm:$0xf]
    %v134 = vlaneseq
    %v135 = vshrl.u32 %v134, 7
    %v136 = vsub.s32 1, %v135
    %v137 = vrot.slane %v63, %v136
    %v142 = vunpack.c.l.b16 %v130
    %v143 = vunpack.c.l.b16 %v131
    %v144 = vunpack.c.l.b16 %v132
    %v145 = vunpack.c.l.b16 %v133
    %v146 = vpack.c.b16 %v143, %v142
    %v147 = vpack.c.b16 %v145, %v144
    %v151 = vsel %vm84, %v129, 0
    %153 = vmatprep.subr.bf16.mxu0 0
    %154 = vmatpush1.bf16.msra.mxu0 %v146
    %155 = vmatprep.subr.bf16.mxu0 0
    %156 = vmatpush1.bf16.msra.mxu0 %v147
    %157 = vmatprep.subr.bf16.mxu0 0
    %158 = vmatpush1.bf16.msra.mxu0 0
    %159 = vmatprep.subr.bf16.mxu0 0
    %160 = vmatpush1.bf16.msra.mxu0 0
    %161 = vmatprep.subr.bf16.mxu0 0
    %162 = vmatpush1.bf16.msra.mxu0 0
    %163 = vmatprep.subr.bf16.mxu0 0
    %164 = vmatpush1.bf16.msra.mxu0 0
    %165 = vmatprep.subr.bf16.mxu0 0
    %166 = vmatpush1.bf16.msra.mxu0 0
    %167 = vmatprep.subr.bf16.mxu0 0
    %168 = vmatpush1.bf16.msra.mxu0 0
    %169 = vmatprep.subr.bf16.mxu0 0
    %170 = vmatpush1.bf16.msra.mxu0 0
    %171 = vmatprep.subr.bf16.mxu0 0
    %172 = vmatpush1.bf16.msra.mxu0 0
    %173 = vmatprep.subr.bf16.mxu0 0
    %174 = vmatpush1.bf16.msra.mxu0 0
    %175 = vmatprep.subr.bf16.mxu0 0
    %176 = vmatpush1.bf16.msra.mxu0 0
    %177 = vmatprep.subr.bf16.mxu0 0
    %178 = vmatpush1.bf16.msra.mxu0 0
    %179 = vmatprep.subr.bf16.mxu0 0
    %180 = vmatpush1.bf16.msra.mxu0 0
    %181 = vmatprep.subr.bf16.mxu0 0
    %182 = vmatpush1.bf16.msra.mxu0 0
    %183 = vmatprep.subr.bf16.mxu0 0
    %184 = vmatpush1.bf16.msra.mxu0 0
    %185 = vmatprep.mubr.bf16.mxu0 0
    %186 = vmatmul.mubr.bf16.gmra.mrb[0].mxu0 %v151
    %v187 = vpop.f32.mrb[0].mxu0
    %v188 = vadd.f32 %v137, %v187
    %v189 = vpop.f32.mrb[0].mxu0
    %v190 = vpop.f32.mrb[0].mxu0
    %v191 = vpop.f32.mrb[0].mxu0
    %192 = vdwg.mxu0
    %v193 = vmax.f32 %v188, 0.0
    %v194 = vld [vmem:[%s3] sm:$0x1]
    %v195 = vpack.c.bf16 %v193, %v193
    %197 = vset.pattern.permute.xlu0 0
    %198 = vperm.xlu0 %197, %v63
    %v199 = vpop.permute.xlu0 %198
    %v200 = vrot.slane %v199, 2
    %v203 = vsel %vm84, %v194, 0
    %v206 = vsel %vm84, %v195, 0
    %208 = vmatprep.subr.bf16.mxu0 0
    %209 = vmatpush1.bf16.xpose.msra.mxu0 %v206
    %210 = vmatprep.subr.bf16.mxu0 0
    %211 = vmatpush1.bf16.xpose.msra.mxu0 0
    %212 = vmatprep.subr.bf16.mxu0 0
    %213 = vmatpush1.bf16.xpose.msra.mxu0 0
    %214 = vmatprep.subr.bf16.mxu0 0
    %215 = vmatpush1.bf16.xpose.msra.mxu0 0
    %216 = vmatprep.subr.bf16.mxu0 0
    %217 = vmatpush1.bf16.xpose.msra.mxu0 0
    %218 = vmatprep.subr.bf16.mxu0 0
    %219 = vmatpush1.bf16.xpose.msra.mxu0 0
    %220 = vmatprep.subr.bf16.mxu0 0
    %221 = vmatpush1.bf16.xpose.msra.mxu0 0
    %222 = vmatprep.subr.bf16.mxu0 0
    %223 = vmatpush1.bf16.xpose.msra.mxu0 0
    %224 = vmatprep.subr.bf16.mxu0 0
    %225 = vmatpush1.bf16.xpose.msra.mxu0 0
    %226 = vmatprep.subr.bf16.mxu0 0
    %227 = vmatpush1.bf16.xpose.msra.mxu0 0
    %228 = vmatprep.subr.bf16.mxu0 0
    %229 = vmatpush1.bf16.xpose.msra.mxu0 0
    %230 = vmatprep.subr.bf16.mxu0 0
    %231 = vmatpush1.bf16.xpose.msra.mxu0 0
    %232 = vmatprep.subr.bf16.mxu0 0
    %233 = vmatpush1.bf16.xpose.msra.mxu0 0
    %234 = vmatprep.subr.bf16.mxu0 0
    %235 = vmatpush1.bf16.xpose.msra.mxu0 0
    %236 = vmatprep.subr.bf16.mxu0 0
    %237 = vmatpush1.bf16.xpose.msra.mxu0 0
    %238 = vmatprep.subr.bf16.mxu0 0
    %239 = vmatpush1.bf16.xpose.msra.mxu0 0
    %240 = vmatprep.mubr.bf16.mxu0 0
    %241 = vmatmul.mubr.bf16.gmra.mrb[0].mxu0 %v203
    %v242 = vpop.f32.mrb[0].mxu0
    %v243 = vadd.f32 %v200, %v242
    %v244 = vpop.f32.mrb[0].mxu0
    %v245 = vpop.f32.mrb[0].mxu0
    %v246 = vpop.f32.mrb[0].mxu0
    %247 = vdwg.mxu0
    %v248 = vxor.u32 %v243, 2147483648
    %v249 = vmul.f32 %v248, 1.442695
    %v250 = vpow.pop %v249
    %v251 = vadd.f32 %v250, 1.0
    %v252 = vrcp.pop %v251
    %v253 = vmul.f32 1.0, %v252
    %vm254 = vcmask 57344
    %255 = vst.msk [vmem:[#allocation8] sm:$0x1] %vm254, %v253
    // Predicated region
    $region34: #{fwd.1} parent=1 // pred_check
      _
    $region35: #{fwd.1} parent=1 // pred_check_branch
      %257 = sbr.rel (0) target = $region37
    $region36: #{fwd.1} parent=1 // pred_region
      %s259 = ssub.s32 16, 16
      %260 = vsyncadd [#allocation4], %s259
      %s262 = sshll.u32 [#allocation8], 4
      %s263 = int_to_ptr.vmem [resolvable:$true] %s262
      %265 = dma.vmem_to_hbm [thread:$0]  %s263, 16, %s5, [#allocation4]
    $region37: #{fwd.1} parent=1 // pred_fallthru
      _
    // Predicated region
    $region38: #{fwd.1} parent=1 // pred_check
      _
    $region39: #{fwd.1} parent=1 // pred_check_branch
      %267 = sbr.rel (0) target = $region41
    $region40: #{fwd.1} parent=1 // pred_region
      %268 = dma.done [#allocation4], 16
    $region41: #{fwd.1} parent=1 // pred_fallthru
      _
    %269 = vsyncpa [#allocation3], 1
    %270 = vsyncpa [#allocation6], 1
    %271 = vsyncpa [#allocation4], 1

</llo_original>
